<compile_context>
chip_gen: v7x
topology: tpu7x:2x2x1
jax: 0.10.0
libtpu: 0.0.40
codegen_flags: <defaults>
</compile_context>

<pallas_src>
import jax
import jax.numpy as jnp
from jax.experimental import pallas as pl
from jax.experimental.pallas import tpu as pltpu


def _round_up(x, m):
    return (x + m - 1) // m * m


def _stacked_gru_kernel(x_ref,      # (Bp, D)        padded layer-0 input
                        h0_ref,     # (L, Bp, Hp)    padded initial hidden states
                        wih_ref,    # (L, D, 3*Hp)   W_ih^T per layer (gates r,z,n in 128-aligned blocks)
                        whh_ref,    # (L, Hp, 3*Hp)  W_hh^T per layer
                        brz_ref,    # (L, 1, 2*Hp)   folded b_ih+b_hh for r,z gates
                        bihn_ref,   # (L, 1, Hp)     b_ih for n gate
                        bhhn_ref,   # (L, 1, Hp)     b_hh for n gate
                        hid_ref):   # (L, Bp, Hp)    output: new hidden state per layer
    L, Bp, Hp = h0_ref.shape
    cur = x_ref[...]                                   # (Bp, D)

    # Static unroll over layers: L is small, per-layer shapes are static, and
    # the scheduler can interleave EUP/VPU/MXU work across adjacent layers.
    for i in range(L):
        w_ih = wih_ref[i] if i == 0 else wih_ref[i, :Hp, :]
        h = h0_ref[i]                                  # (Bp, Hp)

        gi = jnp.dot(cur, w_ih, preferred_element_type=jnp.float32)       # (Bp, 3Hp)
        gh = jnp.dot(h, whh_ref[i], preferred_element_type=jnp.float32)   # (Bp, 3Hp)

        # PyTorch GRUCell gate order: r, z, n.  Gate blocks are 128-aligned.
        rz = jax.nn.sigmoid(gi[:, :2 * Hp] + gh[:, :2 * Hp] + brz_ref[i])
        r = rz[:, :Hp]
        z = rz[:, Hp:]
        n = jnp.tanh(gi[:, 2 * Hp:] + bihn_ref[i] + r * (gh[:, 2 * Hp:] + bhhn_ref[i]))
        h_new = (1.0 - z) * n + z * h                  # (Bp, Hp)

        hid_ref[i] = h_new                             # lane-dense unmasked store

        # TODO(synk): training-mode dropout between layers (random mask) is not
        # modeled in-kernel; forward is eval-mode (identity), matching p=0.
        cur = h_new


def stacked_gru_forward(inp, hidden, params):
    """Mirrors StackedGRU.forward in eval mode (dropout = identity).

    inp:    (B, input_size) float
    hidden: (L, B, H) float  -- per-layer initial hidden states
    params: list of L dicts with PyTorch GRUCell tensors:
            'w_ih' (3H, in_i), 'w_hh' (3H, H), 'b_ih' (3H,), 'b_hh' (3H,)
    returns: (current (B, H), hiddens: list of L arrays (B, H))
    """
    L = len(params)
    B, I = inp.shape
    H = params[0]["w_hh"].shape[1]

    Bp = _round_up(max(B, 8), 8)      # sublane-align the batch
    Hp = _round_up(H, 128)            # lane-align hidden width
    Ip = _round_up(I, 128)            # lane-align layer-0 input width
    D = max(Ip, Hp)

    f32 = jnp.float32
    x_pad = jnp.zeros((Bp, D), f32).at[:B, :I].set(jnp.asarray(inp, f32))
    h0_pad = jnp.zeros((L, Bp, Hp), f32).at[:, :B, :H].set(jnp.asarray(hidden, f32))

    wih_pad = jnp.zeros((L, D, 3 * Hp), f32)
    whh_pad = jnp.zeros((L, Hp, 3 * Hp), f32)
    brz_pad = jnp.zeros((L, 1, 2 * Hp), f32)
    bihn_pad = jnp.zeros((L, 1, Hp), f32)
    bhhn_pad = jnp.zeros((L, 1, Hp), f32)

    for i, p in enumerate(params):
        w_ih = jnp.asarray(p["w_ih"], f32)    # (3H, in_i)
        w_hh = jnp.asarray(p["w_hh"], f32)    # (3H, H)
        b_ih = jnp.asarray(p["b_ih"], f32)    # (3H,)
        b_hh = jnp.asarray(p["b_hh"], f32)    # (3H,)
        in_i = w_ih.shape[1]
        for g in range(3):                    # gate order r, z, n
            wih_pad = wih_pad.at[i, :in_i, g * Hp:g * Hp + H].set(
                w_ih[g * H:(g + 1) * H, :].T)
            whh_pad = whh_pad.at[i, :H, g * Hp:g * Hp + H].set(
                w_hh[g * H:(g + 1) * H, :].T)
        for g in range(2):                    # fold biases for r, z
            brz_pad = brz_pad.at[i, 0, g * Hp:g * Hp + H].set(
                b_ih[g * H:(g + 1) * H] + b_hh[g * H:(g + 1) * H])
        bihn_pad = bihn_pad.at[i, 0, :H].set(b_ih[2 * H:3 * H])
        bhhn_pad = bhhn_pad.at[i, 0, :H].set(b_hh[2 * H:3 * H])

    vmem = pl.BlockSpec(memory_space=pltpu.MemorySpace.VMEM)
    hid_pad = pl.pallas_call(
        _stacked_gru_kernel,
        out_shape=jax.ShapeDtypeStruct((L, Bp, Hp), f32),
        in_specs=[vmem] * 7,
        out_specs=vmem,
    )(x_pad, h0_pad, wih_pad, whh_pad, brz_pad, bihn_pad, bhhn_pad)

    hiddens = [hid_pad[i, :B, :H] for i in range(L)]
    current = hiddens[-1]
    return current, hiddens


def _reference_forward(inp, hidden, params):
    """Pure-JAX reference of StackedGRU.forward (eval mode)."""
    cur = inp
    hiddens = []
    for i, p in enumerate(params):
        H = p["w_hh"].shape[1]
        gi = cur @ p["w_ih"].T + p["b_ih"]
        gh = hidden[i] @ p["w_hh"].T + p["b_hh"]
        r = jax.nn.sigmoid(gi[:, :H] + gh[:, :H])
        z = jax.nn.sigmoid(gi[:, H:2 * H] + gh[:, H:2 * H])
        n = jnp.tanh(gi[:, 2 * H:] + r * gh[:, 2 * H:])
        h_new = (1.0 - z) * n + z * hidden[i]
        hiddens.append(h_new)
        cur = h_new                              # dropout = identity (eval)
    return cur, hiddens


def make_params(key, num_layers, input_size, num_units):
    """Deterministic synthetic GRUCell parameters matching StackedGRU.__init__."""
    params = []
    layer_keys = jax.random.split(key, num_layers)
    scale = 0.2
    in_size = input_size
    for i in range(num_layers):
        k = jax.random.split(layer_keys[i], 4)
        params.append({
            "w_ih": scale * jax.random.normal(k[0], (3 * num_units, in_size), jnp.float32),
            "w_hh": scale * jax.random.normal(k[1], (3 * num_units, num_units), jnp.float32),
            "b_ih": scale * jax.random.normal(k[2], (3 * num_units,), jnp.float32),
            "b_hh": scale * jax.random.normal(k[3], (3 * num_units,), jnp.float32),
        })
        in_size = num_units
    return params


if __name__ == "__main__":
    # Small shapes consistent with StackedGRU(num_layers, input_size, num_units, dropout).
    num_layers = 2
    input_size = 32
    num_units = 32
    batch = 2

    key = jax.random.PRNGKey(0)
    pkey, xkey, hkey = jax.random.split(key, 3)
    params = make_params(pkey, num_layers, input_size, num_units)

    inp = jax.random.normal(xkey, (batch, input_size), jnp.float32)
    hidden = jax.random.normal(hkey, (num_layers, batch, num_units), jnp.float32)

    current, hiddens = stacked_gru_forward(inp, hidden, params)
    current = jax.block_until_ready(current)

    ref_cur, ref_hid = _reference_forward(inp, hidden, params)
    assert current.shape == (batch, num_units)
    assert len(hiddens) == num_layers
    assert jnp.allclose(current, ref_cur, atol=1e-4, rtol=1e-4), "current mismatch"
    for a, b in zip(hiddens, ref_hid):
        assert jnp.allclose(a, b, atol=1e-4, rtol=1e-4), "hidden mismatch"

    print("KERNEL_OK")
</pallas_src>

<mosaic_0001>
module attributes {stable_mosaic.version = 11 : i64} {
  func.func @_stacked_gru_kernel(%arg0: memref<8x128xf32, #tpu.memory_space<vmem>>, %arg1: memref<2x8x128xf32, #tpu.memory_space<vmem>>, %arg2: memref<2x128x384xf32, #tpu.memory_space<vmem>>, %arg3: memref<2x128x384xf32, #tpu.memory_space<vmem>>, %arg4: memref<2x1x256xf32, #tpu.memory_space<vmem>>, %arg5: memref<2x1x128xf32, #tpu.memory_space<vmem>>, %arg6: memref<2x1x128xf32, #tpu.memory_space<vmem>>, %arg7: memref<2x8x128xf32, #tpu.memory_space<vmem>>) attributes {dimension_semantics = [], scalar_prefetch = 0 : i64, scratch_operands = 0 : i64, tpu.core_type = #tpu.core_type<tc>} {
    %c0 = arith.constant 0 : index
    %c0_0 = arith.constant 0 : index
    %0 = vector.load %arg0[%c0, %c0_0] : memref<8x128xf32, #tpu.memory_space<vmem>>, vector<8x128xf32>
    %c0_1 = arith.constant 0 : index
    %c0_2 = arith.constant 0 : index
    %c0_3 = arith.constant 0 : index
    %1 = vector.load %arg2[%c0_1, %c0_2, %c0_3] : memref<2x128x384xf32, #tpu.memory_space<vmem>>, vector<1x128x384xf32>
    %2 = vector.shape_cast %1 : vector<1x128x384xf32> to vector<128x384xf32>
    %c0_4 = arith.constant 0 : index
    %c0_5 = arith.constant 0 : index
    %c0_6 = arith.constant 0 : index
    %3 = vector.load %arg1[%c0_4, %c0_5, %c0_6] : memref<2x8x128xf32, #tpu.memory_space<vmem>>, vector<1x8x128xf32>
    %4 = vector.shape_cast %3 : vector<1x8x128xf32> to vector<8x128xf32>
    %cst = arith.constant dense<0.000000e+00> : vector<8x384xf32>
    %5 = tpu.matmul %0, %2, %cst {dimension_numbers = #tpu.dot_dimension_numbers<[1], [0], [0], [1], [0, 0, 1, 1], [], []>} : vector<8x128xf32>, vector<128x384xf32>, vector<8x384xf32> -> vector<8x384xf32>
    %c0_7 = arith.constant 0 : index
    %c0_8 = arith.constant 0 : index
    %c0_9 = arith.constant 0 : index
    %6 = vector.load %arg3[%c0_7, %c0_8, %c0_9] : memref<2x128x384xf32, #tpu.memory_space<vmem>>, vector<1x128x384xf32>
    %7 = vector.shape_cast %6 : vector<1x128x384xf32> to vector<128x384xf32>
    %cst_10 = arith.constant dense<0.000000e+00> : vector<8x384xf32>
    %8 = tpu.matmul %4, %7, %cst_10 {dimension_numbers = #tpu.dot_dimension_numbers<[1], [0], [0], [1], [0, 0, 1, 1], [], []>} : vector<8x128xf32>, vector<128x384xf32>, vector<8x384xf32> -> vector<8x384xf32>
    %9 = vector.extract_strided_slice %5 {offsets = [0, 0], sizes = [8, 256], strides = [1, 1]} : vector<8x384xf32> to vector<8x256xf32>
    %10 = vector.extract_strided_slice %8 {offsets = [0, 0], sizes = [8, 256], strides = [1, 1]} : vector<8x384xf32> to vector<8x256xf32>
    %11 = arith.addf %9, %10 : vector<8x256xf32>
    %c0_11 = arith.constant 0 : index
    %c0_12 = arith.constant 0 : index
    %c0_13 = arith.constant 0 : index
    %12 = vector.load %arg4[%c0_11, %c0_12, %c0_13] : memref<2x1x256xf32, #tpu.memory_space<vmem>>, vector<1x1x256xf32>
    %13 = vector.shape_cast %12 : vector<1x1x256xf32> to vector<1x256xf32>
    %14 = vector.broadcast %13 : vector<1x256xf32> to vector<8x256xf32>
    %15 = arith.addf %11, %14 : vector<8x256xf32>
    %16 = arith.negf %15 : vector<8x256xf32>
    %17 = math.exp %16 : vector<8x256xf32>
    %cst_14 = arith.constant 1.000000e+00 : f32
    %18 = vector.broadcast %cst_14 : f32 to vector<8x256xf32>
    %19 = arith.addf %18, %17 : vector<8x256xf32>
    %20 = arith.divf %18, %19 : vector<8x256xf32>
    %21 = vector.extract_strided_slice %20 {offsets = [0, 0], sizes = [8, 128], strides = [1, 1]} : vector<8x256xf32> to vector<8x128xf32>
    %22 = vector.extract_strided_slice %20 {offsets = [0, 128], sizes = [8, 128], strides = [1, 1]} : vector<8x256xf32> to vector<8x128xf32>
    %23 = vector.extract_strided_slice %5 {offsets = [0, 256], sizes = [8, 128], strides = [1, 1]} : vector<8x384xf32> to vector<8x128xf32>
    %c0_15 = arith.constant 0 : index
    %c0_16 = arith.constant 0 : index
    %c0_17 = arith.constant 0 : index
    %24 = vector.load %arg5[%c0_15, %c0_16, %c0_17] : memref<2x1x128xf32, #tpu.memory_space<vmem>>, vector<1x1x128xf32>
    %25 = vector.shape_cast %24 : vector<1x1x128xf32> to vector<1x128xf32>
    %26 = vector.broadcast %25 : vector<1x128xf32> to vector<8x128xf32>
    %27 = arith.addf %23, %26 : vector<8x128xf32>
    %28 = vector.extract_strided_slice %8 {offsets = [0, 256], sizes = [8, 128], strides = [1, 1]} : vector<8x384xf32> to vector<8x128xf32>
    %c0_18 = arith.constant 0 : index
    %c0_19 = arith.constant 0 : index
    %c0_20 = arith.constant 0 : index
    %29 = vector.load %arg6[%c0_18, %c0_19, %c0_20] : memref<2x1x128xf32, #tpu.memory_space<vmem>>, vector<1x1x128xf32>
    %30 = vector.shape_cast %29 : vector<1x1x128xf32> to vector<1x128xf32>
    %31 = vector.broadcast %30 : vector<1x128xf32> to vector<8x128xf32>
    %32 = arith.addf %28, %31 : vector<8x128xf32>
    %33 = arith.mulf %21, %32 : vector<8x128xf32>
    %34 = arith.addf %27, %33 : vector<8x128xf32>
    %35 = math.tanh %34 : vector<8x128xf32>
    %cst_21 = arith.constant 1.000000e+00 : f32
    %36 = vector.broadcast %cst_21 : f32 to vector<8x128xf32>
    %37 = arith.subf %36, %22 : vector<8x128xf32>
    %38 = arith.mulf %37, %35 : vector<8x128xf32>
    %39 = arith.mulf %22, %4 : vector<8x128xf32>
    %40 = arith.addf %38, %39 : vector<8x128xf32>
    %c0_22 = arith.constant 0 : index
    %c0_23 = arith.constant 0 : index
    %c0_24 = arith.constant 0 : index
    %41 = vector.load %arg7[%c0_22, %c0_23, %c0_24] : memref<2x8x128xf32, #tpu.memory_space<vmem>>, vector<1x8x128xf32>
    %42 = vector.shape_cast %41 : vector<1x8x128xf32> to vector<8x128xf32>
    %43 = vector.shape_cast %40 : vector<8x128xf32> to vector<1x8x128xf32>
    tpu.vector_store %arg7[%c0_22, %c0_23, %c0_24], %43 {strides = array<i32>} : memref<2x8x128xf32, #tpu.memory_space<vmem>>, vector<1x8x128xf32>,
    %c1 = arith.constant 1 : index
    %c0_25 = arith.constant 0 : index
    %c0_26 = arith.constant 0 : index
    %44 = vector.load %arg2[%c1, %c0_25, %c0_26] : memref<2x128x384xf32, #tpu.memory_space<vmem>>, vector<1x128x384xf32>
    %45 = vector.shape_cast %44 : vector<1x128x384xf32> to vector<128x384xf32>
    %c1_27 = arith.constant 1 : index
    %c0_28 = arith.constant 0 : index
    %c0_29 = arith.constant 0 : index
    %46 = vector.load %arg1[%c1_27, %c0_28, %c0_29] : memref<2x8x128xf32, #tpu.memory_space<vmem>>, vector<1x8x128xf32>
    %47 = vector.shape_cast %46 : vector<1x8x128xf32> to vector<8x128xf32>
    %cst_30 = arith.constant dense<0.000000e+00> : vector<8x384xf32>
    %48 = tpu.matmul %40, %45, %cst_30 {dimension_numbers = #tpu.dot_dimension_numbers<[1], [0], [0], [1], [0, 0, 1, 1], [], []>} : vector<8x128xf32>, vector<128x384xf32>, vector<8x384xf32> -> vector<8x384xf32>
    %c1_31 = arith.constant 1 : index
    %c0_32 = arith.constant 0 : index
    %c0_33 = arith.constant 0 : index
    %49 = vector.load %arg3[%c1_31, %c0_32, %c0_33] : memref<2x128x384xf32, #tpu.memory_space<vmem>>, vector<1x128x384xf32>
    %50 = vector.shape_cast %49 : vector<1x128x384xf32> to vector<128x384xf32>
    %cst_34 = arith.constant dense<0.000000e+00> : vector<8x384xf32>
    %51 = tpu.matmul %47, %50, %cst_34 {dimension_numbers = #tpu.dot_dimension_numbers<[1], [0], [0], [1], [0, 0, 1, 1], [], []>} : vector<8x128xf32>, vector<128x384xf32>, vector<8x384xf32> -> vector<8x384xf32>
    %52 = vector.extract_strided_slice %48 {offsets = [0, 0], sizes = [8, 256], strides = [1, 1]} : vector<8x384xf32> to vector<8x256xf32>
    %53 = vector.extract_strided_slice %51 {offsets = [0, 0], sizes = [8, 256], strides = [1, 1]} : vector<8x384xf32> to vector<8x256xf32>
    %54 = arith.addf %52, %53 : vector<8x256xf32>
    %c1_35 = arith.constant 1 : index
    %c0_36 = arith.constant 0 : index
    %c0_37 = arith.constant 0 : index
    %55 = vector.load %arg4[%c1_35, %c0_36, %c0_37] : memref<2x1x256xf32, #tpu.memory_space<vmem>>, vector<1x1x256xf32>
    %56 = vector.shape_cast %55 : vector<1x1x256xf32> to vector<1x256xf32>
    %57 = vector.broadcast %56 : vector<1x256xf32> to vector<8x256xf32>
    %58 = arith.addf %54, %57 : vector<8x256xf32>
    %59 = arith.negf %58 : vector<8x256xf32>
    %60 = math.exp %59 : vector<8x256xf32>
    %cst_38 = arith.constant 1.000000e+00 : f32
    %61 = vector.broadcast %cst_38 : f32 to vector<8x256xf32>
    %62 = arith.addf %61, %60 : vector<8x256xf32>
    %63 = arith.divf %61, %62 : vector<8x256xf32>
    %64 = vector.extract_strided_slice %63 {offsets = [0, 0], sizes = [8, 128], strides = [1, 1]} : vector<8x256xf32> to vector<8x128xf32>
    %65 = vector.extract_strided_slice %63 {offsets = [0, 128], sizes = [8, 128], strides = [1, 1]} : vector<8x256xf32> to vector<8x128xf32>
    %66 = vector.extract_strided_slice %48 {offsets = [0, 256], sizes = [8, 128], strides = [1, 1]} : vector<8x384xf32> to vector<8x128xf32>
    %c1_39 = arith.constant 1 : index
    %c0_40 = arith.constant 0 : index
    %c0_41 = arith.constant 0 : index
    %67 = vector.load %arg5[%c1_39, %c0_40, %c0_41] : memref<2x1x128xf32, #tpu.memory_space<vmem>>, vector<1x1x128xf32>
    %68 = vector.shape_cast %67 : vector<1x1x128xf32> to vector<1x128xf32>
    %69 = vector.broadcast %68 : vector<1x128xf32> to vector<8x128xf32>
    %70 = arith.addf %66, %69 : vector<8x128xf32>
    %71 = vector.extract_strided_slice %51 {offsets = [0, 256], sizes = [8, 128], strides = [1, 1]} : vector<8x384xf32> to vector<8x128xf32>
    %c1_42 = arith.constant 1 : index
    %c0_43 = arith.constant 0 : index
    %c0_44 = arith.constant 0 : index
    %72 = vector.load %arg6[%c1_42, %c0_43, %c0_44] : memref<2x1x128xf32, #tpu.memory_space<vmem>>, vector<1x1x128xf32>
    %73 = vector.shape_cast %72 : vector<1x1x128xf32> to vector<1x128xf32>
    %74 = vector.broadcast %73 : vector<1x128xf32> to vector<8x128xf32>
    %75 = arith.addf %71, %74 : vector<8x128xf32>
    %76 = arith.mulf %64, %75 : vector<8x128xf32>
    %77 = arith.addf %70, %76 : vector<8x128xf32>
    %78 = math.tanh %77 : vector<8x128xf32>
    %cst_45 = arith.constant 1.000000e+00 : f32
    %79 = vector.broadcast %cst_45 : f32 to vector<8x128xf32>
    %80 = arith.subf %79, %65 : vector<8x128xf32>
    %81 = arith.mulf %80, %78 : vector<8x128xf32>
    %82 = arith.mulf %65, %47 : vector<8x128xf32>
    %83 = arith.addf %81, %82 : vector<8x128xf32>
    %c1_46 = arith.constant 1 : index
    %c0_47 = arith.constant 0 : index
    %c0_48 = arith.constant 0 : index
    %84 = vector.load %arg7[%c1_46, %c0_47, %c0_48] : memref<2x8x128xf32, #tpu.memory_space<vmem>>, vector<1x8x128xf32>
    %85 = vector.shape_cast %84 : vector<1x8x128xf32> to vector<8x128xf32>
    %86 = vector.shape_cast %83 : vector<8x128xf32> to vector<1x8x128xf32>
    tpu.vector_store %arg7[%c1_46, %c0_47, %c0_48], %86 {strides = array<i32>} : memref<2x8x128xf32, #tpu.memory_space<vmem>>, vector<1x8x128xf32>,
    return
  }
}

</mosaic_0001>

<llo_original>
// kernel: tpu_custom_call.1
$region0: #{tpu_custom_call.1}
  #allocation0 [shape = 'u32[]', space=smem, size = 0x4, offset = 0x4, fixed_abs, tag = 'smem constant byte address 0x4 - core index']
  #allocation1 [shape = 'u32[144,128]{1,0:T(1,128)}', space=vmem, size = 0x12000, scoped, tag = 'internal scratch']
  %s0 = inlined_call_operand.hbm [shape: f32[8,128], index: 0, kind: input, shape index: {}]
  %s1 = inlined_call_operand.hbm [shape: f32[2,8,128], index: 1, kind: input, shape index: {}]
  %s2 = inlined_call_operand.hbm [shape: f32[2,128,384], index: 2, kind: input, shape index: {}]
  %s3 = inlined_call_operand.hbm [shape: f32[2,128,384], index: 3, kind: input, shape index: {}]
  %s4 = inlined_call_operand.vmem [shape: f32[2,1,256], index: 4, kind: input, shape index: {}]
  %s5 = inlined_call_operand.vmem [shape: f32[2,1,128], index: 5, kind: input, shape index: {}]
  %s6 = inlined_call_operand.vmem [shape: f32[2,1,128], index: 6, kind: input, shape index: {}]
  %s7 = inlined_call_operand.hbm [shape: f32[2,8,128], index: 7, kind: output, shape index: {}]
  %s8 = sld [smem:[#allocation0]]
  $region54: #{tpu_custom_call.1} parent=0
    _
  %s10 = ssub.s32 1, %s8
  %s11 = scalar_select 0, %s10, %s8
  $region1: #{tpu_custom_call.1} parent=0
    #allocation2 [shape = 'u8[4096]{0}', space=vmem, size = 0x1000, scoped, tag = 'input window, operand 0, single buffered']
    #allocation3 [shape = 's32[1]{0}', space=sflag, size = 0x4, scoped, tag = 'scoped memory for tpu_custom_call.1']
    #allocation4 [shape = 's32[1]{0}', space=sflag, size = 0x4, scoped, tag = 'scoped memory for tpu_custom_call.1']
    #allocation5 [shape = 'u8[8192]{0}', space=vmem, size = 0x2000, scoped, tag = 'input window, operand 1, single buffered']
    #allocation6 [shape = 's32[1]{0}', space=sflag, size = 0x4, scoped, tag = 'scoped memory for tpu_custom_call.1']
    #allocation7 [shape = 'u8[393216]{0}', space=vmem, size = 0x60000, scoped, tag = 'input window, operand 2, single buffered']
    #allocation8 [shape = 'u8[393216]{0}', space=vmem, size = 0x60000, scoped, tag = 'input window, operand 3, single buffered']
    #allocation9 [shape = 's32[1]{0}', space=sflag, size = 0x4, scoped, tag = 'scoped memory for tpu_custom_call.1']
    #allocation10 [shape = 'u8[8192]{0}', space=vmem, size = 0x2000, scoped, tag = 'output window, operand 0, single buffered']
    %12 = vsyncpa [#allocation3], 0
    %13 = vsyncpa [#allocation6], 0
    %14 = vsyncpa [#allocation9], 0
    %15 = vsyncpa [#allocation4], 0
    // Predicated region
    $region2: #{tpu_custom_call.1} parent=1 // pred_check
      _
    $region3: #{tpu_custom_call.1} parent=1 // pred_check_branch
      %17 = sbr.rel (0) target = $region5
    $region4: #{tpu_custom_call.1} parent=1 // pred_region
      %s19 = ssub.s32 128, 128
      %20 = vsyncadd [#allocation3], %s19
      %s22 = sshll.u32 [#allocation2], 4
      %s23 = int_to_ptr.vmem [resolvable:$true] %s22
      %25 = dma.hbm_to_vmem [thread:$0]  %s0, 128, %s23, [#allocation3]
    $region5: #{tpu_custom_call.1} parent=1 // pred_fallthru
      _
    // Predicated region
    $region6: #{tpu_custom_call.1} parent=1 // pred_check
      _
    $region7: #{tpu_custom_call.1} parent=1 // pred_check_branch
      %27 = sbr.rel (0) target = $region9
    $region8: #{tpu_custom_call.1} parent=1 // pred_region
      %s29 = ssub.s32 256, 256
      %30 = vsyncadd [#allocation6], %s29
      %s31 = sshll.u32 [#allocation5], 4
      %s32 = int_to_ptr.vmem [resolvable:$true] %s31
      %37 = dma.hbm_to_vmem [thread:$0]  %s1, 256, %s32, [#allocation6], 128, 128, 8
    $region9: #{tpu_custom_call.1} parent=1 // pred_fallthru
      _
    // Predicated region
    $region10: #{tpu_custom_call.1} parent=1 // pred_check
      _
    $region11: #{tpu_custom_call.1} parent=1 // pred_check_branch
      %39 = sbr.rel (0) target = $region13
    $region12: #{tpu_custom_call.1} parent=1 // pred_region
      %s41 = ssub.s32 12288, 12288
      %42 = vsyncadd [#allocation6], %s41
      %s43 = sshll.u32 [#allocation7], 4
      %s44 = int_to_ptr.vmem [resolvable:$true] %s43
      %49 = dma.hbm_to_vmem [thread:$0]  %s2, 12288, %s44, [#allocation6], 384, 384, 24
    $region13: #{tpu_custom_call.1} parent=1 // pred_fallthru
      _
    // Predicated region
    $region14: #{tpu_custom_call.1} parent=1 // pred_check
      _
    $region15: #{tpu_custom_call.1} parent=1 // pred_check_branch
      %51 = sbr.rel (0) target = $region17
    $region16: #{tpu_custom_call.1} parent=1 // pred_region
      %s53 = ssub.s32 12288, 12288
      %54 = vsyncadd [#allocation9], %s53
      %s55 = sshll.u32 [#allocation8], 4
      %s56 = int_to_ptr.vmem [resolvable:$true] %s55
      %61 = dma.hbm_to_vmem [thread:$0]  %s3, 12288, %s56, [#allocation9], 384, 384, 24
    $region17: #{tpu_custom_call.1} parent=1 // pred_fallthru
      _
    // Predicated region
    $region18: #{tpu_custom_call.1} parent=1 // pred_check
      _
    $region19: #{tpu_custom_call.1} parent=1 // pred_check_branch
      %63 = sbr.rel (0) target = $region21
    $region20: #{tpu_custom_call.1} parent=1 // pred_region
      _
    $region21: #{tpu_custom_call.1} parent=1 // pred_fallthru
      _
    // Predicated region
    $region22: #{tpu_custom_call.1} parent=1 // pred_check
      _
    $region23: #{tpu_custom_call.1} parent=1 // pred_check_branch
      %65 = sbr.rel (0) target = $region25
    $region24: #{tpu_custom_call.1} parent=1 // pred_region
      _
    $region25: #{tpu_custom_call.1} parent=1 // pred_fallthru
      _
    // Predicated region
    $region26: #{tpu_custom_call.1} parent=1 // pred_check
      _
    $region27: #{tpu_custom_call.1} parent=1 // pred_check_branch
      %67 = sbr.rel (0) target = $region29
    $region28: #{tpu_custom_call.1} parent=1 // pred_region
      _
    $region29: #{tpu_custom_call.1} parent=1 // pred_fallthru
      _
    // Predicated region
    $region30: #{tpu_custom_call.1} parent=1 // pred_check
      _
    $region31: #{tpu_custom_call.1} parent=1 // pred_check_branch
      %69 = sbr.rel (0) target = $region33
    $region32: #{tpu_custom_call.1} parent=1 // pred_region
      %70 = dma.done [#allocation3], 128
    $region33: #{tpu_custom_call.1} parent=1 // pred_fallthru
      _
    // Predicated region
    $region34: #{tpu_custom_call.1} parent=1 // pred_check
      _
    $region35: #{tpu_custom_call.1} parent=1 // pred_check_branch
      %72 = sbr.rel (0) target = $region37
    $region36: #{tpu_custom_call.1} parent=1 // pred_region
      %73 = dma.done [#allocation6], 256
    $region37: #{tpu_custom_call.1} parent=1 // pred_fallthru
      _
    // Predicated region
    $region38: #{tpu_custom_call.1} parent=1 // pred_check
      _
    $region39: #{tpu_custom_call.1} parent=1 // pred_check_branch
      %75 = sbr.rel (0) target = $region41
    $region40: #{tpu_custom_call.1} parent=1 // pred_region
      %76 = dma.done [#allocation6], 12288
    $region41: #{tpu_custom_call.1} parent=1 // pred_fallthru
      _
    // Predicated region
    $region42: #{tpu_custom_call.1} parent=1 // pred_check
      _
    $region43: #{tpu_custom_call.1} parent=1 // pred_check_branch
      %78 = sbr.rel (0) target = $region45
    $region44: #{tpu_custom_call.1} parent=1 // pred_region
      %79 = dma.done [#allocation9], 12288
    $region45: #{tpu_custom_call.1} parent=1 // pred_fallthru
      _
    %v80 = vld [vmem:[#allocation2] sm:$0xff]
    %v81 = vld [vmem:[#allocation7] sm:$0xff]
    %v82 = vld [vmem:[#allocation7 + $0x8] sm:$0xff]
    %v83 = vld [vmem:[#allocation7 + $0x10] sm:$0xff]
    %v84 = vld [vmem:[#allocation7 + $0x18] sm:$0xff]
    %v85 = vld [vmem:[#allocation7 + $0x20] sm:$0xff]
    %v86 = vld [vmem:[#allocation7 + $0x28] sm:$0xff]
    %v87 = vld [vmem:[#allocation7 + $0x30] sm:$0xff]
    %v88 = vld [vmem:[#allocation7 + $0x38] sm:$0xff]
    %v89 = vld [vmem:[#allocation7 + $0x40] sm:$0xff]
    %v90 = vld [vmem:[#allocation7 + $0x48] sm:$0xff]
    %v91 = vld [vmem:[#allocation7 + $0x50] sm:$0xff]
    %v92 = vld [vmem:[#allocation7 + $0x58] sm:$0xff]
    %v93 = vld [vmem:[#allocation7 + $0x60] sm:$0xff]
    %v94 = vld [vmem:[#allocation7 + $0x68] sm:$0xff]
    %v95 = vld [vmem:[#allocation7 + $0x70] sm:$0xff]
    %v96 = vld [vmem:[#allocation7 + $0x78] sm:$0xff]
    %v97 = vld [vmem:[#allocation7 + $0x80] sm:$0xff]
    %v98 = vld [vmem:[#allocation7 + $0x88] sm:$0xff]
    %v99 = vld [vmem:[#allocation7 + $0x90] sm:$0xff]
    %v100 = vld [vmem:[#allocation7 + $0x98] sm:$0xff]
    %v101 = vld [vmem:[#allocation7 + $0xa0] sm:$0xff]
    %v102 = vld [vmem:[#allocation7 + $0xa8] sm:$0xff]
    %v103 = vld [vmem:[#allocation7 + $0xb0] sm:$0xff]
    %v104 = vld [vmem:[#allocation7 + $0xb8] sm:$0xff]
    %v105 = vld [vmem:[#allocation7 + $0xc0] sm:$0xff]
    %v106 = vld [vmem:[#allocation7 + $0xc8] sm:$0xff]
    %v107 = vld [vmem:[#allocation7 + $0xd0] sm:$0xff]
    %v108 = vld [vmem:[#allocation7 + $0xd8] sm:$0xff]
    %v109 = vld [vmem:[#allocation7 + $0xe0] sm:$0xff]
    %v110 = vld [vmem:[#allocation7 + $0xe8] sm:$0xff]
    %v111 = vld [vmem:[#allocation7 + $0xf0] sm:$0xff]
    %v112 = vld [vmem:[#allocation7 + $0xf8] sm:$0xff]
    %v113 = vld [vmem:[#allocation7 + $0x100] sm:$0xff]
    %v114 = vld [vmem:[#allocation7 + $0x108] sm:$0xff]
    %v115 = vld [vmem:[#allocation7 + $0x110] sm:$0xff]
    %v116 = vld [vmem:[#allocation7 + $0x118] sm:$0xff]
    %v117 = vld [vmem:[#allocation7 + $0x120] sm:$0xff]
    %v118 = vld [vmem:[#allocation7 + $0x128] sm:$0xff]
    %v119 = vld [vmem:[#allocation7 + $0x130] sm:$0xff]
    %v120 = vld [vmem:[#allocation7 + $0x138] sm:$0xff]
    %v121 = vld [vmem:[#allocation7 + $0x140] sm:$0xff]
    %v122 = vld [vmem:[#allocation7 + $0x148] sm:$0xff]
    %v123 = vld [vmem:[#allocation7 + $0x150] sm:$0xff]
    %v124 = vld [vmem:[#allocation7 + $0x158] sm:$0xff]
    %v125 = vld [vmem:[#allocation7 + $0x160] sm:$0xff]
    %v126 = vld [vmem:[#allocation7 + $0x168] sm:$0xff]
    %v127 = vld [vmem:[#allocation7 + $0x170] sm:$0xff]
    %v128 = vld [vmem:[#allocation7 + $0x178] sm:$0xff]
    %v129 = vld [vmem:[#allocation5] sm:$0xff]
    %130 = vmatprep.subr.mxu0 %v82
    %131 = vmatpush1.msra.mxu0 %v81
    %132 = vmatprep.subr.mxu0 %v85
    %133 = vmatpush1.msra.mxu0 %v84
    %134 = vmatprep.subr.mxu0 %v88
    %135 = vmatpush1.msra.mxu0 %v87
    %136 = vmatprep.subr.mxu0 %v91
    %137 = vmatpush1.msra.mxu0 %v90
    %138 = vmatprep.subr.mxu0 %v94
    %139 = vmatpush1.msra.mxu0 %v93
    %140 = vmatprep.subr.mxu0 %v97
    %141 = vmatpush1.msra.mxu0 %v96
    %142 = vmatprep.subr.mxu0 %v100
    %143 = vmatpush1.msra.mxu0 %v99
    %144 = vmatprep.subr.mxu0 %v103
    %145 = vmatpush1.msra.mxu0 %v102
    %146 = vmatprep.subr.mxu0 %v106
    %147 = vmatpush1.msra.mxu0 %v105
    %148 = vmatprep.subr.mxu0 %v109
    %149 = vmatpush1.msra.mxu0 %v108
    %150 = vmatprep.subr.mxu0 %v112
    %151 = vmatpush1.msra.mxu0 %v111
    %152 = vmatprep.subr.mxu0 %v115
    %153 = vmatpush1.msra.mxu0 %v114
    %154 = vmatprep.subr.mxu0 %v118
    %155 = vmatpush1.msra.mxu0 %v117
    %156 = vmatprep.subr.mxu0 %v121
    %157 = vmatpush1.msra.mxu0 %v120
    %158 = vmatprep.subr.mxu0 %v124
    %159 = vmatpush1.msra.mxu0 %v123
    %160 = vmatprep.subr.mxu0 %v127
    %161 = vmatpush1.msra.mxu0 %v126
    %162 = vmatprep.subr.mxu0 0.0
    %163 = vmatpush1.msra.mxu0 0.0
    %164 = vmatprep.subr.mxu0 0.0
    %165 = vmatpush1.msra.mxu0 0.0
    %166 = vmatprep.subr.mxu0 0.0
    %167 = vmatpush1.msra.mxu0 0.0
    %168 = vmatprep.subr.mxu0 0.0
    %169 = vmatpush1.msra.mxu0 0.0
    %170 = vmatprep.subr.mxu0 0.0
    %171 = vmatpush1.msra.mxu0 0.0
    %172 = vmatprep.subr.mxu0 0.0
    %173 = vmatpush1.msra.mxu0 0.0
    %174 = vmatprep.subr.mxu0 0.0
    %175 = vmatpush1.msra.mxu0 0.0
    %176 = vmatprep.subr.mxu0 0.0
    %177 = vmatpush1.msra.mxu0 0.0
    %178 = vmatprep.subr.mxu0 0.0
    %179 = vmatpush1.msra.mxu0 0.0
    %180 = vmatprep.subr.mxu0 0.0
    %181 = vmatpush1.msra.mxu0 0.0
    %182 = vmatprep.subr.mxu0 0.0
    %183 = vmatpush1.msra.mxu0 0.0
    %184 = vmatprep.subr.mxu0 0.0
    %185 = vmatpush1.msra.mxu0 0.0
    %186 = vmatprep.subr.mxu0 0.0
    %187 = vmatpush1.msra.mxu0 0.0
    %188 = vmatprep.subr.mxu0 0.0
    %189 = vmatpush1.msra.mxu0 0.0
    %190 = vmatprep.subr.mxu0 0.0
    %191 = vmatpush1.msra.mxu0 0.0
    %192 = vmatprep.subr.mxu0 0.0
    %193 = vmatpush1.msra.mxu0 0.0
    %194 = vmatprep.mubr.f32.mxu0 0.0
    %195 = vmatmul.mubr.f32.gmra.mrb[0].mxu0 %v80
    %v196 = vpop.f32.mrb[0].mxu0
    %v197 = vadd.f32 0.0, %v196
    %v198 = vpop.f32.mrb[0].mxu0
    %v199 = vadd.f32 0.0, %v198
    %200 = vdwg.mxu0
    %201 = vmatprep.subr.mxu0 0.0
    %202 = vmatpush1.msra.mxu0 %v83
    %203 = vmatprep.subr.mxu0 0.0
    %204 = vmatpush1.msra.mxu0 %v86
    %205 = vmatprep.subr.mxu0 0.0
    %206 = vmatpush1.msra.mxu0 %v89
    %207 = vmatprep.subr.mxu0 0.0
    %208 = vmatpush1.msra.mxu0 %v92
    %209 = vmatprep.subr.mxu0 0.0
    %210 = vmatpush1.msra.mxu0 %v95
    %211 = vmatprep.subr.mxu0 0.0
    %212 = vmatpush1.msra.mxu0 %v98
    %213 = vmatprep.subr.mxu0 0.0
    %214 = vmatpush1.msra.mxu0 %v101
    %215 = vmatprep.subr.mxu0 0.0
    %216 = vmatpush1.msra.mxu0 %v104
    %217 = vmatprep.subr.mxu0 0.0
    %218 = vmatpush1.msra.mxu0 %v107
    %219 = vmatprep.subr.mxu0 0.0
    %220 = vmatpush1.msra.mxu0 %v110
    %221 = vmatprep.subr.mxu0 0.0
    %222 = vmatpush1.msra.mxu0 %v113
    %223 = vmatprep.subr.mxu0 0.0
    %224 = vmatpush1.msra.mxu0 %v116
    %225 = vmatprep.subr.mxu0 0.0
    %226 = vmatpush1.msra.mxu0 %v119
    %227 = vmatprep.subr.mxu0 0.0
    %228 = vmatpush1.msra.mxu0 %v122
    %229 = vmatprep.subr.mxu0 0.0
    %230 = vmatpush1.msra.mxu0 %v125
    %231 = vmatprep.subr.mxu0 0.0
    %232 = vmatpush1.msra.mxu0 %v128
    %233 = vmatprep.subr.mxu0 0.0
    %234 = vmatpush1.msra.mxu0 0.0
    %235 = vmatprep.subr.mxu0 0.0
    %236 = vmatpush1.msra.mxu0 0.0
    %237 = vmatprep.subr.mxu0 0.0
    %238 = vmatpush1.msra.mxu0 0.0
    %239 = vmatprep.subr.mxu0 0.0
    %240 = vmatpush1.msra.mxu0 0.0
    %241 = vmatprep.subr.mxu0 0.0
    %242 = vmatpush1.msra.mxu0 0.0
    %243 = vmatprep.subr.mxu0 0.0
    %244 = vmatpush1.msra.mxu0 0.0
    %245 = vmatprep.subr.mxu0 0.0
    %246 = vmatpush1.msra.mxu0 0.0
    %247 = vmatprep.subr.mxu0 0.0
    %248 = vmatpush1.msra.mxu0 0.0
    %249 = vmatprep.subr.mxu0 0.0
    %250 = vmatpush1.msra.mxu0 0.0
    %251 = vmatprep.subr.mxu0 0.0
    %252 = vmatpush1.msra.mxu0 0.0
    %253 = vmatprep.subr.mxu0 0.0
    %254 = vmatpush1.msra.mxu0 0.0
    %255 = vmatprep.subr.mxu0 0.0
    %256 = vmatpush1.msra.mxu0 0.0
    %257 = vmatprep.subr.mxu0 0.0
    %258 = vmatpush1.msra.mxu0 0.0
    %259 = vmatprep.subr.mxu0 0.0
    %260 = vmatpush1.msra.mxu0 0.0
    %261 = vmatprep.subr.mxu0 0.0
    %262 = vmatpush1.msra.mxu0 0.0
    %263 = vmatprep.subr.mxu0 0.0
    %264 = vmatpush1.msra.mxu0 0.0
    %265 = vmatprep.mubr.f32.mxu0 0.0
    %266 = vmatmul.mubr.f32.gmra.mrb[0].mxu0 %v80
    %v267 = vpop.f32.mrb[0].mxu0
    %v268 = vadd.f32 0.0, %v267
    %v269 = vpop.f32.mrb[0].mxu0
    %270 = vdwg.mxu0
    %v271 = vld [vmem:[#allocation8] sm:$0xff]
    %v272 = vld [vmem:[#allocation8 + $0x8] sm:$0xff]
    %v273 = vld [vmem:[#allocation8 + $0x10] sm:$0xff]
    %v274 = vld [vmem:[#allocation8 + $0x18] sm:$0xff]
    %v275 = vld [vmem:[#allocation8 + $0x20] sm:$0xff]
    %v276 = vld [vmem:[#allocation8 + $0x28] sm:$0xff]
    %v277 = vld [vmem:[#allocation8 + $0x30] sm:$0xff]
    %v278 = vld [vmem:[#allocation8 + $0x38] sm:$0xff]
    %v279 = vld [vmem:[#allocation8 + $0x40] sm:$0xff]
    %v280 = vld [vmem:[#allocation8 + $0x48] sm:$0xff]
    %v281 = vld [vmem:[#allocation8 + $0x50] sm:$0xff]
    %v282 = vld [vmem:[#allocation8 + $0x58] sm:$0xff]
    %v283 = vld [vmem:[#allocation8 + $0x60] sm:$0xff]
    %v284 = vld [vmem:[#allocation8 + $0x68] sm:$0xff]
    %v285 = vld [vmem:[#allocation8 + $0x70] sm:$0xff]
    %v286 = vld [vmem:[#allocation8 + $0x78] sm:$0xff]
    %v287 = vld [vmem:[#allocation8 + $0x80] sm:$0xff]
    %v288 = vld [vmem:[#allocation8 + $0x88] sm:$0xff]
    %v289 = vld [vmem:[#allocation8 + $0x90] sm:$0xff]
    %v290 = vld [vmem:[#allocation8 + $0x98] sm:$0xff]
    %v291 = vld [vmem:[#allocation8 + $0xa0] sm:$0xff]
    %v292 = vld [vmem:[#allocation8 + $0xa8] sm:$0xff]
    %v293 = vld [vmem:[#allocation8 + $0xb0] sm:$0xff]
    %v294 = vld [vmem:[#allocation8 + $0xb8] sm:$0xff]
    %v295 = vld [vmem:[#allocation8 + $0xc0] sm:$0xff]
    %v296 = vld [vmem:[#allocation8 + $0xc8] sm:$0xff]
    %v297 = vld [vmem:[#allocation8 + $0xd0] sm:$0xff]
    %v298 = vld [vmem:[#allocation8 + $0xd8] sm:$0xff]
    %v299 = vld [vmem:[#allocation8 + $0xe0] sm:$0xff]
    %v300 = vld [vmem:[#allocation8 + $0xe8] sm:$0xff]
    %v301 = vld [vmem:[#allocation8 + $0xf0] sm:$0xff]
    %v302 = vld [vmem:[#allocation8 + $0xf8] sm:$0xff]
    %v303 = vld [vmem:[#allocation8 + $0x100] sm:$0xff]
    %v304 = vld [vmem:[#allocation8 + $0x108] sm:$0xff]
    %v305 = vld [vmem:[#allocation8 + $0x110] sm:$0xff]
    %v306 = vld [vmem:[#allocation8 + $0x118] sm:$0xff]
    %v307 = vld [vmem:[#allocation8 + $0x120] sm:$0xff]
    %v308 = vld [vmem:[#allocation8 + $0x128] sm:$0xff]
    %v309 = vld [vmem:[#allocation8 + $0x130] sm:$0xff]
    %v310 = vld [vmem:[#allocation8 + $0x138] sm:$0xff]
    %v311 = vld [vmem:[#allocation8 + $0x140] sm:$0xff]
    %v312 = vld [vmem:[#allocation8 + $0x148] sm:$0xff]
    %v313 = vld [vmem:[#allocation8 + $0x150] sm:$0xff]
    %v314 = vld [vmem:[#allocation8 + $0x158] sm:$0xff]
    %v315 = vld [vmem:[#allocation8 + $0x160] sm:$0xff]
    %v316 = vld [vmem:[#allocation8 + $0x168] sm:$0xff]
    %v317 = vld [vmem:[#allocation8 + $0x170] sm:$0xff]
    %v318 = vld [vmem:[#allocation8 + $0x178] sm:$0xff]
    %319 = vmatprep.subr.mxu0 %v272
    %320 = vmatpush1.msra.mxu0 %v271
    %321 = vmatprep.subr.mxu0 %v275
    %322 = vmatpush1.msra.mxu0 %v274
    %323 = vmatprep.subr.mxu0 %v278
    %324 = vmatpush1.msra.mxu0 %v277
    %325 = vmatprep.subr.mxu0 %v281
    %326 = vmatpush1.msra.mxu0 %v280
    %327 = vmatprep.subr.mxu0 %v284
    %328 = vmatpush1.msra.mxu0 %v283
    %329 = vmatprep.subr.mxu0 %v287
    %330 = vmatpush1.msra.mxu0 %v286
    %331 = vmatprep.subr.mxu0 %v290
    %332 = vmatpush1.msra.mxu0 %v289
    %333 = vmatprep.subr.mxu0 %v293
    %334 = vmatpush1.msra.mxu0 %v292
    %335 = vmatprep.subr.mxu0 %v296
    %336 = vmatpush1.msra.mxu0 %v295
    %337 = vmatprep.subr.mxu0 %v299
    %338 = vmatpush1.msra.mxu0 %v298
    %339 = vmatprep.subr.mxu0 %v302
    %340 = vmatpush1.msra.mxu0 %v301
    %341 = vmatprep.subr.mxu0 %v305
    %342 = vmatpush1.msra.mxu0 %v304
    %343 = vmatprep.subr.mxu0 %v308
    %344 = vmatpush1.msra.mxu0 %v307
    %345 = vmatprep.subr.mxu0 %v311
    %346 = vmatpush1.msra.mxu0 %v310
    %347 = vmatprep.subr.mxu0 %v314
    %348 = vmatpush1.msra.mxu0 %v313
    %349 = vmatprep.subr.mxu0 %v317
    %350 = vmatpush1.msra.mxu0 %v316
    %351 = vmatprep.subr.mxu0 0.0
    %352 = vmatpush1.msra.mxu0 0.0
    %353 = vmatprep.subr.mxu0 0.0
    %354 = vmatpush1.msra.mxu0 0.0
    %355 = vmatprep.subr.mxu0 0.0
    %356 = vmatpush1.msra.mxu0 0.0
    %357 = vmatprep.subr.mxu0 0.0
    %358 = vmatpush1.msra.mxu0 0.0
    %359 = vmatprep.subr.mxu0 0.0
    %360 = vmatpush1.msra.mxu0 0.0
    %361 = vmatprep.subr.mxu0 0.0
    %362 = vmatpush1.msra.mxu0 0.0
    %363 = vmatprep.subr.mxu0 0.0
    %364 = vmatpush1.msra.mxu0 0.0
    %365 = vmatprep.subr.mxu0 0.0
    %366 = vmatpush1.msra.mxu0 0.0
    %367 = vmatprep.subr.mxu0 0.0
    %368 = vmatpush1.msra.mxu0 0.0
    %369 = vmatprep.subr.mxu0 0.0
    %370 = vmatpush1.msra.mxu0 0.0
    %371 = vmatprep.subr.mxu0 0.0
    %372 = vmatpush1.msra.mxu0 0.0
    %373 = vmatprep.subr.mxu0 0.0
    %374 = vmatpush1.msra.mxu0 0.0
    %375 = vmatprep.subr.mxu0 0.0
    %376 = vmatpush1.msra.mxu0 0.0
    %377 = vmatprep.subr.mxu0 0.0
    %378 = vmatpush1.msra.mxu0 0.0
    %379 = vmatprep.subr.mxu0 0.0
    %380 = vmatpush1.msra.mxu0 0.0
    %381 = vmatprep.subr.mxu0 0.0
    %382 = vmatpush1.msra.mxu0 0.0
    %383 = vmatprep.mubr.f32.mxu0 0.0
    %384 = vmatmul.mubr.f32.gmra.mrb[0].mxu0 %v129
    %v385 = vpop.f32.mrb[0].mxu0
    %v386 = vadd.f32 0.0, %v385
    %v387 = vpop.f32.mrb[0].mxu0
    %v388 = vadd.f32 0.0, %v387
    %389 = vdwg.mxu0
    %390 = vmatprep.subr.mxu0 0.0
    %391 = vmatpush1.msra.mxu0 %v273
    %392 = vmatprep.subr.mxu0 0.0
    %393 = vmatpush1.msra.mxu0 %v276
    %394 = vmatprep.subr.mxu0 0.0
    %395 = vmatpush1.msra.mxu0 %v279
    %396 = vmatprep.subr.mxu0 0.0
    %397 = vmatpush1.msra.mxu0 %v282
    %398 = vmatprep.subr.mxu0 0.0
    %399 = vmatpush1.msra.mxu0 %v285
    %400 = vmatprep.subr.mxu0 0.0
    %401 = vmatpush1.msra.mxu0 %v288
    %402 = vmatprep.subr.mxu0 0.0
    %403 = vmatpush1.msra.mxu0 %v291
    %404 = vmatprep.subr.mxu0 0.0
    %405 = vmatpush1.msra.mxu0 %v294
    %406 = vmatprep.subr.mxu0 0.0
    %407 = vmatpush1.msra.mxu0 %v297
    %408 = vmatprep.subr.mxu0 0.0
    %409 = vmatpush1.msra.mxu0 %v300
    %410 = vmatprep.subr.mxu0 0.0
    %411 = vmatpush1.msra.mxu0 %v303
    %412 = vmatprep.subr.mxu0 0.0
    %413 = vmatpush1.msra.mxu0 %v306
    %414 = vmatprep.subr.mxu0 0.0
    %415 = vmatpush1.msra.mxu0 %v309
    %416 = vmatprep.subr.mxu0 0.0
    %417 = vmatpush1.msra.mxu0 %v312
    %418 = vmatprep.subr.mxu0 0.0
    %419 = vmatpush1.msra.mxu0 %v315
    %420 = vmatprep.subr.mxu0 0.0
    %421 = vmatpush1.msra.mxu0 %v318
    %422 = vmatprep.subr.mxu0 0.0
    %423 = vmatpush1.msra.mxu0 0.0
    %424 = vmatprep.subr.mxu0 0.0
    %425 = vmatpush1.msra.mxu0 0.0
    %426 = vmatprep.subr.mxu0 0.0
    %427 = vmatpush1.msra.mxu0 0.0
    %428 = vmatprep.subr.mxu0 0.0
    %429 = vmatpush1.msra.mxu0 0.0
    %430 = vmatprep.subr.mxu0 0.0
    %431 = vmatpush1.msra.mxu0 0.0
    %432 = vmatprep.subr.mxu0 0.0
    %433 = vmatpush1.msra.mxu0 0.0
    %434 = vmatprep.subr.mxu0 0.0
    %435 = vmatpush1.msra.mxu0 0.0
    %436 = vmatprep.subr.mxu0 0.0
    %437 = vmatpush1.msra.mxu0 0.0
    %438 = vmatprep.subr.mxu0 0.0
    %439 = vmatpush1.msra.mxu0 0.0
    %440 = vmatprep.subr.mxu0 0.0
    %441 = vmatpush1.msra.mxu0 0.0
    %442 = vmatprep.subr.mxu0 0.0
    %443 = vmatpush1.msra.mxu0 0.0
    %444 = vmatprep.subr.mxu0 0.0
    %445 = vmatpush1.msra.mxu0 0.0
    %446 = vmatprep.subr.mxu0 0.0
    %447 = vmatpush1.msra.mxu0 0.0
    %448 = vmatprep.subr.mxu0 0.0
    %449 = vmatpush1.msra.mxu0 0.0
    %450 = vmatprep.subr.mxu0 0.0
    %451 = vmatpush1.msra.mxu0 0.0
    %452 = vmatprep.subr.mxu0 0.0
    %453 = vmatpush1.msra.mxu0 0.0
    %454 = vmatprep.mubr.f32.mxu0 0.0
    %455 = vmatmul.mubr.f32.gmra.mrb[0].mxu0 %v129
    %v456 = vpop.f32.mrb[0].mxu0
    %v457 = vadd.f32 0.0, %v456
    %v458 = vpop.f32.mrb[0].mxu0
    %459 = vdwg.mxu0
    %v460 = vadd.f32 %v197, %v386
    %v461 = vadd.f32 %v199, %v388
    %v462 = vld [vmem:[%s4] sm:$0x3]
    %v464 = vlaneseq
    %v465 = vshrl.u32 %v464, 7
    %v466 = vsub.s32 0, %v465
    %v467 = vrot.slane %v462, %v466
    %v468 = vlaneseq
    %v469 = vshrl.u32 %v468, 7
    %v470 = vsub.s32 1, %v469
    %v471 = vrot.slane %v462, %v470
    %v474 = vadd.f32 %v460, %v467
    %v475 = vadd.f32 %v461, %v471
    %v476 = vxor.u32 %v474, 2147483648
    %v477 = vxor.u32 %v475, 2147483648
    %v478 = vmul.f32 %v476, 1.442695
    %v479 = vpow.pop %v478
    %v480 = vmul.f32 %v477, 1.442695
    %v481 = vpow.pop %v480
    %v482 = vadd.f32 %v479, 1.0
    %v483 = vadd.f32 %v481, 1.0
    %v484 = vrcp.pop %v482
    %v485 = vmul.f32 1.0, %v484
    %v486 = vrcp.pop %v483
    %v487 = vmul.f32 1.0, %v486
    %v488 = vld [vmem:[%s5] sm:$0x1]
    %v490 = vlaneseq
    %v491 = vshrl.u32 %v490, 7
    %v492 = vsub.s32 0, %v491
    %v493 = vrot.slane %v488, %v492
    %v495 = vadd.f32 %v268, %v493
    %v496 = vld [vmem:[%s6] sm:$0x1]
    %v498 = vlaneseq
    %v499 = vshrl.u32 %v498, 7
    %v500 = vsub.s32 0, %v499
    %v501 = vrot.slane %v496, %v500
    %v503 = vadd.f32 %v457, %v501
    %v504 = vmul.f32 %v485, %v503
    %v505 = vadd.f32 %v495, %v504
    %v506 = vtanh.pop %v505
    %v507 = vsub.f32 1.0, %v487
    %v508 = vmul.f32 %v507, %v506
    %v509 = vmul.f32 %v487, %v129
    %v510 = vadd.f32 %v508, %v509
    %511 = vst [vmem:[#allocation10] sm:$0xff] %v510
    %s512 = scalar_lea.vmem [#allocation7], 384
    %v513 = vld [vmem:[%s512] sm:$0xff]
    %v514 = vld [vmem:[%s512 + $0x8] sm:$0xff]
    %v515 = vld [vmem:[%s512 + $0x10] sm:$0xff]
    %v516 = vld [vmem:[%s512 + $0x18] sm:$0xff]
    %v517 = vld [vmem:[%s512 + $0x20] sm:$0xff]
    %v518 = vld [vmem:[%s512 + $0x28] sm:$0xff]
    %v519 = vld [vmem:[%s512 + $0x30] sm:$0xff]
    %v520 = vld [vmem:[%s512 + $0x38] sm:$0xff]
    %v521 = vld [vmem:[%s512 + $0x40] sm:$0xff]
    %v522 = vld [vmem:[%s512 + $0x48] sm:$0xff]
    %v523 = vld [vmem:[%s512 + $0x50] sm:$0xff]
    %v524 = vld [vmem:[%s512 + $0x58] sm:$0xff]
    %v525 = vld [vmem:[%s512 + $0x60] sm:$0xff]
    %v526 = vld [vmem:[%s512 + $0x68] sm:$0xff]
    %v527 = vld [vmem:[%s512 + $0x70] sm:$0xff]
    %v528 = vld [vmem:[%s512 + $0x78] sm:$0xff]
    %v529 = vld [vmem:[%s512 + $0x80] sm:$0xff]
    %v530 = vld [vmem:[%s512 + $0x88] sm:$0xff]
    %v531 = vld [vmem:[%s512 + $0x90] sm:$0xff]
    %v532 = vld [vmem:[%s512 + $0x98] sm:$0xff]
    %v533 = vld [vmem:[%s512 + $0xa0] sm:$0xff]
    %v534 = vld [vmem:[%s512 + $0xa8] sm:$0xff]
    %v535 = vld [vmem:[%s512 + $0xb0] sm:$0xff]
    %v536 = vld [vmem:[%s512 + $0xb8] sm:$0xff]
    %v537 = vld [vmem:[%s512 + $0xc0] sm:$0xff]
    %v538 = vld [vmem:[%s512 + $0xc8] sm:$0xff]
    %v539 = vld [vmem:[%s512 + $0xd0] sm:$0xff]
    %v540 = vld [vmem:[%s512 + $0xd8] sm:$0xff]
    %v541 = vld [vmem:[%s512 + $0xe0] sm:$0xff]
    %v542 = vld [vmem:[%s512 + $0xe8] sm:$0xff]
    %v543 = vld [vmem:[%s512 + $0xf0] sm:$0xff]
    %v544 = vld [vmem:[%s512 + $0xf8] sm:$0xff]
    %v545 = vld [vmem:[%s512 + $0x100] sm:$0xff]
    %v546 = vld [vmem:[%s512 + $0x108] sm:$0xff]
    %v547 = vld [vmem:[%s512 + $0x110] sm:$0xff]
    %v548 = vld [vmem:[%s512 + $0x118] sm:$0xff]
    %v549 = vld [vmem:[%s512 + $0x120] sm:$0xff]
    %v550 = vld [vmem:[%s512 + $0x128] sm:$0xff]
    %v551 = vld [vmem:[%s512 + $0x130] sm:$0xff]
    %v552 = vld [vmem:[%s512 + $0x138] sm:$0xff]
    %v553 = vld [vmem:[%s512 + $0x140] sm:$0xff]
    %v554 = vld [vmem:[%s512 + $0x148] sm:$0xff]
    %v555 = vld [vmem:[%s512 + $0x150] sm:$0xff]
    %v556 = vld [vmem:[%s512 + $0x158] sm:$0xff]
    %v557 = vld [vmem:[%s512 + $0x160] sm:$0xff]
    %v558 = vld [vmem:[%s512 + $0x168] sm:$0xff]
    %v559 = vld [vmem:[%s512 + $0x170] sm:$0xff]
    %v560 = vld [vmem:[%s512 + $0x178] sm:$0xff]
    %s561 = scalar_lea.vmem [#allocation5], 8
    %v562 = vld [vmem:[%s561] sm:$0xff]
    %563 = vmatprep.subr.mxu0 %v514
    %564 = vmatpush1.msra.mxu0 %v513
    %565 = vmatprep.subr.mxu0 %v517
    %566 = vmatpush1.msra.mxu0 %v516
    %567 = vmatprep.subr.mxu0 %v520
    %568 = vmatpush1.msra.mxu0 %v519
    %569 = vmatprep.subr.mxu0 %v523
    %570 = vmatpush1.msra.mxu0 %v522
    %571 = vmatprep.subr.mxu0 %v526
    %572 = vmatpush1.msra.mxu0 %v525
    %573 = vmatprep.subr.mxu0 %v529
    %574 = vmatpush1.msra.mxu0 %v528
    %575 = vmatprep.subr.mxu0 %v532
    %576 = vmatpush1.msra.mxu0 %v531
    %577 = vmatprep.subr.mxu0 %v535
    %578 = vmatpush1.msra.mxu0 %v534
    %579 = vmatprep.subr.mxu0 %v538
    %580 = vmatpush1.msra.mxu0 %v537
    %581 = vmatprep.subr.mxu0 %v541
    %582 = vmatpush1.msra.mxu0 %v540
    %583 = vmatprep.subr.mxu0 %v544
    %584 = vmatpush1.msra.mxu0 %v543
    %585 = vmatprep.subr.mxu0 %v547
    %586 = vmatpush1.msra.mxu0 %v546
    %587 = vmatprep.subr.mxu0 %v550
    %588 = vmatpush1.msra.mxu0 %v549
    %589 = vmatprep.subr.mxu0 %v553
    %590 = vmatpush1.msra.mxu0 %v552
    %591 = vmatprep.subr.mxu0 %v556
    %592 = vmatpush1.msra.mxu0 %v555
    %593 = vmatprep.subr.mxu0 %v559
    %594 = vmatpush1.msra.mxu0 %v558
    %595 = vmatprep.subr.mxu0 0.0
    %596 = vmatpush1.msra.mxu0 0.0
    %597 = vmatprep.subr.mxu0 0.0
    %598 = vmatpush1.msra.mxu0 0.0
    %599 = vmatprep.subr.mxu0 0.0
    %600 = vmatpush1.msra.mxu0 0.0
    %601 = vmatprep.subr.mxu0 0.0
    %602 = vmatpush1.msra.mxu0 0.0
    %603 = vmatprep.subr.mxu0 0.0
    %604 = vmatpush1.msra.mxu0 0.0
    %605 = vmatprep.subr.mxu0 0.0
    %606 = vmatpush1.msra.mxu0 0.0
    %607 = vmatprep.subr.mxu0 0.0
    %608 = vmatpush1.msra.mxu0 0.0
    %609 = vmatprep.subr.mxu0 0.0
    %610 = vmatpush1.msra.mxu0 0.0
    %611 = vmatprep.subr.mxu0 0.0
    %612 = vmatpush1.msra.mxu0 0.0
    %613 = vmatprep.subr.mxu0 0.0
    %614 = vmatpush1.msra.mxu0 0.0
    %615 = vmatprep.subr.mxu0 0.0
    %616 = vmatpush1.msra.mxu0 0.0
    %617 = vmatprep.subr.mxu0 0.0
    %618 = vmatpush1.msra.mxu0 0.0
    %619 = vmatprep.subr.mxu0 0.0
    %620 = vmatpush1.msra.mxu0 0.0
    %621 = vmatprep.subr.mxu0 0.0
    %622 = vmatpush1.msra.mxu0 0.0
    %623 = vmatprep.subr.mxu0 0.0
    %624 = vmatpush1.msra.mxu0 0.0
    %625 = vmatprep.subr.mxu0 0.0
    %626 = vmatpush1.msra.mxu0 0.0
    %627 = vmatprep.mubr.f32.mxu0 0.0
    %628 = vmatmul.mubr.f32.gmra.mrb[0].mxu0 %v510
    %v629 = vpop.f32.mrb[0].mxu0
    %v630 = vadd.f32 0.0, %v629
    %v631 = vpop.f32.mrb[0].mxu0
    %v632 = vadd.f32 0.0, %v631
    %633 = vdwg.mxu0
    %634 = vmatprep.subr.mxu0 0.0
    %635 = vmatpush1.msra.mxu0 %v515
    %636 = vmatprep.subr.mxu0 0.0
    %637 = vmatpush1.msra.mxu0 %v518
    %638 = vmatprep.subr.mxu0 0.0
    %639 = vmatpush1.msra.mxu0 %v521
    %640 = vmatprep.subr.mxu0 0.0
    %641 = vmatpush1.msra.mxu0 %v524
    %642 = vmatprep.subr.mxu0 0.0
    %643 = vmatpush1.msra.mxu0 %v527
    %644 = vmatprep.subr.mxu0 0.0
    %645 = vmatpush1.msra.mxu0 %v530
    %646 = vmatprep.subr.mxu0 0.0
    %647 = vmatpush1.msra.mxu0 %v533
    %648 = vmatprep.subr.mxu0 0.0
    %649 = vmatpush1.msra.mxu0 %v536
    %650 = vmatprep.subr.mxu0 0.0
    %651 = vmatpush1.msra.mxu0 %v539
    %652 = vmatprep.subr.mxu0 0.0
    %653 = vmatpush1.msra.mxu0 %v542
    %654 = vmatprep.subr.mxu0 0.0
    %655 = vmatpush1.msra.mxu0 %v545
    %656 = vmatprep.subr.mxu0 0.0
    %657 = vmatpush1.msra.mxu0 %v548
    %658 = vmatprep.subr.mxu0 0.0
    %659 = vmatpush1.msra.mxu0 %v551
    %660 = vmatprep.subr.mxu0 0.0
    %661 = vmatpush1.msra.mxu0 %v554
    %662 = vmatprep.subr.mxu0 0.0
    %663 = vmatpush1.msra.mxu0 %v557
    %664 = vmatprep.subr.mxu0 0.0
    %665 = vmatpush1.msra.mxu0 %v560
    %666 = vmatprep.subr.mxu0 0.0
    %667 = vmatpush1.msra.mxu0 0.0
    %668 = vmatprep.subr.mxu0 0.0
    %669 = vmatpush1.msra.mxu0 0.0
    %670 = vmatprep.subr.mxu0 0.0
    %671 = vmatpush1.msra.mxu0 0.0
    %672 = vmatprep.subr.mxu0 0.0
    %673 = vmatpush1.msra.mxu0 0.0
    %674 = vmatprep.subr.mxu0 0.0
    %675 = vmatpush1.msra.mxu0 0.0
    %676 = vmatprep.subr.mxu0 0.0
    %677 = vmatpush1.msra.mxu0 0.0
    %678 = vmatprep.subr.mxu0 0.0
    %679 = vmatpush1.msra.mxu0 0.0
    %680 = vmatprep.subr.mxu0 0.0
    %681 = vmatpush1.msra.mxu0 0.0
    %682 = vmatprep.subr.mxu0 0.0
    %683 = vmatpush1.msra.mxu0 0.0
    %684 = vmatprep.subr.mxu0 0.0
    %685 = vmatpush1.msra.mxu0 0.0
    %686 = vmatprep.subr.mxu0 0.0
    %687 = vmatpush1.msra.mxu0 0.0
    %688 = vmatprep.subr.mxu0 0.0
    %689 = vmatpush1.msra.mxu0 0.0
    %690 = vmatprep.subr.mxu0 0.0
    %691 = vmatpush1.msra.mxu0 0.0
    %692 = vmatprep.subr.mxu0 0.0
    %693 = vmatpush1.msra.mxu0 0.0
    %694 = vmatprep.subr.mxu0 0.0
    %695 = vmatpush1.msra.mxu0 0.0
    %696 = vmatprep.subr.mxu0 0.0
    %697 = vmatpush1.msra.mxu0 0.0
    %698 = vmatprep.mubr.f32.mxu0 0.0
    %699 = vmatmul.mubr.f32.gmra.mrb[0].mxu0 %v510
    %v700 = vpop.f32.mrb[0].mxu0
    %v701 = vadd.f32 0.0, %v700
    %v702 = vpop.f32.mrb[0].mxu0
    %703 = vdwg.mxu0
    %s704 = scalar_lea.vmem [#allocation8], 384
    %v705 = vld [vmem:[%s704] sm:$0xff]
    %v706 = vld [vmem:[%s704 + $0x8] sm:$0xff]
    %v707 = vld [vmem:[%s704 + $0x10] sm:$0xff]
    %v708 = vld [vmem:[%s704 + $0x18] sm:$0xff]
    %v709 = vld [vmem:[%s704 + $0x20] sm:$0xff]
    %v710 = vld [vmem:[%s704 + $0x28] sm:$0xff]
    %v711 = vld [vmem:[%s704 + $0x30] sm:$0xff]
    %v712 = vld [vmem:[%s704 + $0x38] sm:$0xff]
    %v713 = vld [vmem:[%s704 + $0x40] sm:$0xff]
    %v714 = vld [vmem:[%s704 + $0x48] sm:$0xff]
    %v715 = vld [vmem:[%s704 + $0x50] sm:$0xff]
    %v716 = vld [vmem:[%s704 + $0x58] sm:$0xff]
    %v717 = vld [vmem:[%s704 + $0x60] sm:$0xff]
    %v718 = vld [vmem:[%s704 + $0x68] sm:$0xff]
    %v719 = vld [vmem:[%s704 + $0x70] sm:$0xff]
    %v720 = vld [vmem:[%s704 + $0x78] sm:$0xff]
    %v721 = vld [vmem:[%s704 + $0x80] sm:$0xff]
    %v722 = vld [vmem:[%s704 + $0x88] sm:$0xff]
    %v723 = vld [vmem:[%s704 + $0x90] sm:$0xff]
    %v724 = vld [vmem:[%s704 + $0x98] sm:$0xff]
    %v725 = vld [vmem:[%s704 + $0xa0] sm:$0xff]
    %v726 = vld [vmem:[%s704 + $0xa8] sm:$0xff]
    %v727 = vld [vmem:[%s704 + $0xb0] sm:$0xff]
    %v728 = vld [vmem:[%s704 + $0xb8] sm:$0xff]
    %v729 = vld [vmem:[%s704 + $0xc0] sm:$0xff]
    %v730 = vld [vmem:[%s704 + $0xc8] sm:$0xff]
    %v731 = vld [vmem:[%s704 + $0xd0] sm:$0xff]
    %v732 = vld [vmem:[%s704 + $0xd8] sm:$0xff]
    %v733 = vld [vmem:[%s704 + $0xe0] sm:$0xff]
    %v734 = vld [vmem:[%s704 + $0xe8] sm:$0xff]
    %v735 = vld [vmem:[%s704 + $0xf0] sm:$0xff]
    %v736 = vld [vmem:[%s704 + $0xf8] sm:$0xff]
    %v737 = vld [vmem:[%s704 + $0x100] sm:$0xff]
    %v738 = vld [vmem:[%s704 + $0x108] sm:$0xff]
    %v739 = vld [vmem:[%s704 + $0x110] sm:$0xff]
    %v740 = vld [vmem:[%s704 + $0x118] sm:$0xff]
    %v741 = vld [vmem:[%s704 + $0x120] sm:$0xff]
    %v742 = vld [vmem:[%s704 + $0x128] sm:$0xff]
    %v743 = vld [vmem:[%s704 + $0x130] sm:$0xff]
    %v744 = vld [vmem:[%s704 + $0x138] sm:$0xff]
    %v745 = vld [vmem:[%s704 + $0x140] sm:$0xff]
    %v746 = vld [vmem:[%s704 + $0x148] sm:$0xff]
    %v747 = vld [vmem:[%s704 + $0x150] sm:$0xff]
    %v748 = vld [vmem:[%s704 + $0x158] sm:$0xff]
    %v749 = vld [vmem:[%s704 + $0x160] sm:$0xff]
    %v750 = vld [vmem:[%s704 + $0x168] sm:$0xff]
    %v751 = vld [vmem:[%s704 + $0x170] sm:$0xff]
    %v752 = vld [vmem:[%s704 + $0x178] sm:$0xff]
    %753 = vmatprep.subr.mxu0 %v706
    %754 = vmatpush1.msra.mxu0 %v705
    %755 = vmatprep.subr.mxu0 %v709
    %756 = vmatpush1.msra.mxu0 %v708
    %757 = vmatprep.subr.mxu0 %v712
    %758 = vmatpush1.msra.mxu0 %v711
    %759 = vmatprep.subr.mxu0 %v715
    %760 = vmatpush1.msra.mxu0 %v714
    %761 = vmatprep.subr.mxu0 %v718
    %762 = vmatpush1.msra.mxu0 %v717
    %763 = vmatprep.subr.mxu0 %v721
    %764 = vmatpush1.msra.mxu0 %v720
    %765 = vmatprep.subr.mxu0 %v724
    %766 = vmatpush1.msra.mxu0 %v723
    %767 = vmatprep.subr.mxu0 %v727
    %768 = vmatpush1.msra.mxu0 %v726
    %769 = vmatprep.subr.mxu0 %v730
    %770 = vmatpush1.msra.mxu0 %v729
    %771 = vmatprep.subr.mxu0 %v733
    %772 = vmatpush1.msra.mxu0 %v732
    %773 = vmatprep.subr.mxu0 %v736
    %774 = vmatpush1.msra.mxu0 %v735
    %775 = vmatprep.subr.mxu0 %v739
    %776 = vmatpush1.msra.mxu0 %v738
    %777 = vmatprep.subr.mxu0 %v742
    %778 = vmatpush1.msra.mxu0 %v741
    %779 = vmatprep.subr.mxu0 %v745
    %780 = vmatpush1.msra.mxu0 %v744
    %781 = vmatprep.subr.mxu0 %v748
    %782 = vmatpush1.msra.mxu0 %v747
    %783 = vmatprep.subr.mxu0 %v751
    %784 = vmatpush1.msra.mxu0 %v750
    %785 = vmatprep.subr.mxu0 0.0
    %786 = vmatpush1.msra.mxu0 0.0
    %787 = vmatprep.subr.mxu0 0.0
    %788 = vmatpush1.msra.mxu0 0.0
    %789 = vmatprep.subr.mxu0 0.0
    %790 = vmatpush1.msra.mxu0 0.0
    %791 = vmatprep.subr.mxu0 0.0
    %792 = vmatpush1.msra.mxu0 0.0
    %793 = vmatprep.subr.mxu0 0.0
    %794 = vmatpush1.msra.mxu0 0.0
    %795 = vmatprep.subr.mxu0 0.0
    %796 = vmatpush1.msra.mxu0 0.0
    %797 = vmatprep.subr.mxu0 0.0
    %798 = vmatpush1.msra.mxu0 0.0
    %799 = vmatprep.subr.mxu0 0.0
    %800 = vmatpush1.msra.mxu0 0.0
    %801 = vmatprep.subr.mxu0 0.0
    %802 = vmatpush1.msra.mxu0 0.0
    %803 = vmatprep.subr.mxu0 0.0
    %804 = vmatpush1.msra.mxu0 0.0
    %805 = vmatprep.subr.mxu0 0.0
    %806 = vmatpush1.msra.mxu0 0.0
    %807 = vmatprep.subr.mxu0 0.0
    %808 = vmatpush1.msra.mxu0 0.0
    %809 = vmatprep.subr.mxu0 0.0
    %810 = vmatpush1.msra.mxu0 0.0
    %811 = vmatprep.subr.mxu0 0.0
    %812 = vmatpush1.msra.mxu0 0.0
    %813 = vmatprep.subr.mxu0 0.0
    %814 = vmatpush1.msra.mxu0 0.0
    %815 = vmatprep.subr.mxu0 0.0
    %816 = vmatpush1.msra.mxu0 0.0
    %817 = vmatprep.mubr.f32.mxu0 0.0
    %818 = vmatmul.mubr.f32.gmra.mrb[0].mxu0 %v562
    %v819 = vpop.f32.mrb[0].mxu0
    %v820 = vadd.f32 0.0, %v819
    %v821 = vpop.f32.mrb[0].mxu0
    %v822 = vadd.f32 0.0, %v821
    %823 = vdwg.mxu0
    %824 = vmatprep.subr.mxu0 0.0
    %825 = vmatpush1.msra.mxu0 %v707
    %826 = vmatprep.subr.mxu0 0.0
    %827 = vmatpush1.msra.mxu0 %v710
    %828 = vmatprep.subr.mxu0 0.0
    %829 = vmatpush1.msra.mxu0 %v713
    %830 = vmatprep.subr.mxu0 0.0
    %831 = vmatpush1.msra.mxu0 %v716
    %832 = vmatprep.subr.mxu0 0.0
    %833 = vmatpush1.msra.mxu0 %v719
    %834 = vmatprep.subr.mxu0 0.0
    %835 = vmatpush1.msra.mxu0 %v722
    %836 = vmatprep.subr.mxu0 0.0
    %837 = vmatpush1.msra.mxu0 %v725
    %838 = vmatprep.subr.mxu0 0.0
    %839 = vmatpush1.msra.mxu0 %v728
    %840 = vmatprep.subr.mxu0 0.0
    %841 = vmatpush1.msra.mxu0 %v731
    %842 = vmatprep.subr.mxu0 0.0
    %843 = vmatpush1.msra.mxu0 %v734
    %844 = vmatprep.subr.mxu0 0.0
    %845 = vmatpush1.msra.mxu0 %v737
    %846 = vmatprep.subr.mxu0 0.0
    %847 = vmatpush1.msra.mxu0 %v740
    %848 = vmatprep.subr.mxu0 0.0
    %849 = vmatpush1.msra.mxu0 %v743
    %850 = vmatprep.subr.mxu0 0.0
    %851 = vmatpush1.msra.mxu0 %v746
    %852 = vmatprep.subr.mxu0 0.0
    %853 = vmatpush1.msra.mxu0 %v749
    %854 = vmatprep.subr.mxu0 0.0
    %855 = vmatpush1.msra.mxu0 %v752
    %856 = vmatprep.subr.mxu0 0.0
    %857 = vmatpush1.msra.mxu0 0.0
    %858 = vmatprep.subr.mxu0 0.0
    %859 = vmatpush1.msra.mxu0 0.0
    %860 = vmatprep.subr.mxu0 0.0
    %861 = vmatpush1.msra.mxu0 0.0
    %862 = vmatprep.subr.mxu0 0.0
    %863 = vmatpush1.msra.mxu0 0.0
    %864 = vmatprep.subr.mxu0 0.0
    %865 = vmatpush1.msra.mxu0 0.0
    %866 = vmatprep.subr.mxu0 0.0
    %867 = vmatpush1.msra.mxu0 0.0
    %868 = vmatprep.subr.mxu0 0.0
    %869 = vmatpush1.msra.mxu0 0.0
    %870 = vmatprep.subr.mxu0 0.0
    %871 = vmatpush1.msra.mxu0 0.0
    %872 = vmatprep.subr.mxu0 0.0
    %873 = vmatpush1.msra.mxu0 0.0
    %874 = vmatprep.subr.mxu0 0.0
    %875 = vmatpush1.msra.mxu0 0.0
    %876 = vmatprep.subr.mxu0 0.0
    %877 = vmatpush1.msra.mxu0 0.0
    %878 = vmatprep.subr.mxu0 0.0
    %879 = vmatpush1.msra.mxu0 0.0
    %880 = vmatprep.subr.mxu0 0.0
    %881 = vmatpush1.msra.mxu0 0.0
    %882 = vmatprep.subr.mxu0 0.0
    %883 = vmatpush1.msra.mxu0 0.0
    %884 = vmatprep.subr.mxu0 0.0
    %885 = vmatpush1.msra.mxu0 0.0
    %886 = vmatprep.subr.mxu0 0.0
    %887 = vmatpush1.msra.mxu0 0.0
    %888 = vmatprep.mubr.f32.mxu0 0.0
    %889 = vmatmul.mubr.f32.gmra.mrb[0].mxu0 %v562
    %v890 = vpop.f32.mrb[0].mxu0
    %v891 = vadd.f32 0.0, %v890
    %v892 = vpop.f32.mrb[0].mxu0
    %893 = vdwg.mxu0
    %v894 = vadd.f32 %v630, %v820
    %v895 = vadd.f32 %v632, %v822
    %s896 = scalar_lea.vmem %s4, 2
    %v897 = vld [vmem:[%s896] sm:$0x3]
    %v899 = vlaneseq
    %v900 = vshrl.u32 %v899, 7
    %v901 = vsub.s32 0, %v900
    %v902 = vrot.slane %v897, %v901
    %v903 = vlaneseq
    %v904 = vshrl.u32 %v903, 7
    %v905 = vsub.s32 1, %v904
    %v906 = vrot.slane %v897, %v905
    %v909 = vadd.f32 %v894, %v902
    %v910 = vadd.f32 %v895, %v906
    %v911 = vxor.u32 %v909, 2147483648
    %v912 = vxor.u32 %v910, 2147483648
    %v913 = vmul.f32 %v911, 1.442695
    %v914 = vpow.pop %v913
    %v915 = vmul.f32 %v912, 1.442695
    %v916 = vpow.pop %v915
    %v917 = vadd.f32 %v914, 1.0
    %v918 = vadd.f32 %v916, 1.0
    %v919 = vrcp.pop %v917
    %v920 = vmul.f32 1.0, %v919
    %v921 = vrcp.pop %v918
    %v922 = vmul.f32 1.0, %v921
    %s923 = scalar_lea.vmem %s5, 1
    %v924 = vld [vmem:[%s923] sm:$0x1]
    %v926 = vlaneseq
    %v927 = vshrl.u32 %v926, 7
    %v928 = vsub.s32 0, %v927
    %v929 = vrot.slane %v924, %v928
    %v931 = vadd.f32 %v701, %v929
    %s932 = scalar_lea.vmem %s6, 1
    %v933 = vld [vmem:[%s932] sm:$0x1]
    %v935 = vlaneseq
    %v936 = vshrl.u32 %v935, 7
    %v937 = vsub.s32 0, %v936
    %v938 = vrot.slane %v933, %v937
    %v940 = vadd.f32 %v891, %v938
    %v941 = vmul.f32 %v920, %v940
    %v942 = vadd.f32 %v931, %v941
    %v943 = vtanh.pop %v942
    %v944 = vsub.f32 1.0, %v922
    %v945 = vmul.f32 %v944, %v943
    %v946 = vmul.f32 %v922, %v562
    %v947 = vadd.f32 %v945, %v946
    %s948 = scalar_lea.vmem [#allocation10], 8
    %949 = vst [vmem:[%s948] sm:$0xff] %v947
    // Predicated region
    $region46: #{tpu_custom_call.1} parent=1 // pred_check
      _
    $region47: #{tpu_custom_call.1} parent=1 // pred_check_branch
      %951 = sbr.rel (0) target = $region49
    $region48: #{tpu_custom_call.1} parent=1 // pred_region
      %s953 = ssub.s32 256, 256
      %954 = vsyncadd [#allocation4], %s953
      %s955 = sshll.u32 [#allocation10], 4
      %s956 = int_to_ptr.vmem [resolvable:$true] %s955
      %961 = dma.vmem_to_hbm [thread:$0]  %s956, 256, %s7, [#allocation4], 128, 128, 8
    $region49: #{tpu_custom_call.1} parent=1 // pred_fallthru
      _
    // Predicated region
    $region50: #{tpu_custom_call.1} parent=1 // pred_check
      _
    $region51: #{tpu_custom_call.1} parent=1 // pred_check_branch
      %963 = sbr.rel (0) target = $region53
    $region52: #{tpu_custom_call.1} parent=1 // pred_region
      %964 = dma.done [#allocation4], 256
    $region53: #{tpu_custom_call.1} parent=1 // pred_fallthru
      _
    %965 = vsyncpa [#allocation3], 1
    %966 = vsyncpa [#allocation6], 1
    %967 = vsyncpa [#allocation9], 1
    %968 = vsyncpa [#allocation4], 1

</llo_original>
